<compile_context>
chip_gen: v7x
topology: tpu7x:2x2x1
jax: 0.10.0
libtpu: 0.0.40
codegen_flags: <defaults>
</compile_context>

<pallas_src>
import functools
import math

import jax
import jax.numpy as jnp
from jax.experimental import pallas as pl
from jax.experimental.pallas import tpu as pltpu

EPS = 1e-5
VMEM_LIMIT = 32 * 1024 * 1024


def _row_tile(m):
    for t in (1024, 512, 256, 128, 64, 32, 16, 8):
        if m % t == 0:
            return t
    return m


def _cparams(n_par=1):
    return pltpu.CompilerParams(
        dimension_semantics=("parallel",) * n_par,
        vmem_limit_bytes=VMEM_LIMIT)


# --------------------------- Pallas kernels ---------------------------------

@functools.lru_cache(maxsize=None)
def _make_matmul_stats_kernel(apply_act):
    """Row-tiled matmul (optionally with fused per-column BN+ReLU on the
    input) that also emits per-tile per-channel sum / sum-of-squares."""

    def kernel(*refs):
        if apply_act:
            x_ref, s_ref, b_ref, w_ref, o_ref, sum_ref, sq_ref = refs
            a = jnp.maximum(x_ref[...] * s_ref[...] + b_ref[...], 0.0)
        else:
            x_ref, w_ref, o_ref, sum_ref, sq_ref = refs
            a = x_ref[...]
        y = jnp.dot(a.astype(jnp.bfloat16), w_ref[...],
                    preferred_element_type=jnp.float32)
        o_ref[...] = y
        sum_ref[...] = jnp.sum(y, axis=0).reshape(1, 1, -1)
        sq_ref[...] = jnp.sum(y * y, axis=0).reshape(1, 1, -1)

    return kernel


@functools.lru_cache(maxsize=None)
def _make_clique1x1_kernel(npieces):
    """Fused BN+ReLU + 1x1 conv over a variadic list of channel pieces (the
    channel concat is never materialized in HBM), plus output statistics."""

    def kernel(*refs):
        xs = refs[:npieces]
        ss = refs[npieces:2 * npieces]
        bs = refs[2 * npieces:3 * npieces]
        ws = refs[3 * npieces:4 * npieces]
        o_ref, sum_ref, sq_ref = refs[4 * npieces:]
        acc = None
        for x_r, s_r, b_r, w_r in zip(xs, ss, bs, ws):
            act = jnp.maximum(x_r[...] * s_r[...] + b_r[...], 0.0)
            d = jnp.dot(act.astype(jnp.bfloat16), w_r[...],
                        preferred_element_type=jnp.float32)
            acc = d if acc is None else acc + d
        o_ref[...] = acc
        sum_ref[...] = jnp.sum(acc, axis=0).reshape(1, 1, -1)
        sq_ref[...] = jnp.sum(acc * acc, axis=0).reshape(1, 1, -1)

    return kernel


@functools.lru_cache(maxsize=None)
def _make_conv_kernel(phases, ho, wo, c_slab, c_out, apply_act):
    """Direct multi-tap stride-1 convolution on a (pre-padded) per-image VMEM
    block, with the preceding BN+ReLU fused in and per-image output stats.
    `phases` is a static tuple of tuples of (dy, dx, channel_offset) taps; each
    phase contributes `c_out` output channels (phase slabs are concatenated).
    No im2col is ever written to HBM; taps are accumulated in registers."""
    num_phases = len(phases)

    def kernel(*refs):
        if apply_act:
            x_ref, s_ref, b_ref, w_ref = refs[:4]
        else:
            x_ref, w_ref = refs[:2]
        o_ref, sum_ref, sq_ref = refs[-3:]
        x = x_ref[...][0]                                   # (Hp, Wp, Cin) f32
        if apply_act:
            x = jnp.maximum(x * s_ref[...][0] + b_ref[...][0], 0.0)
        a = x.astype(jnp.bfloat16)
        w = w_ref[...]                                      # (P, T*c_slab, c_out)
        outs = []
        for p, taps in enumerate(phases):
            acc = None
            for t, (dy, dx, coff) in enumerate(taps):
                win = a[dy:dy + ho, dx:dx + wo, coff:coff + c_slab]
                win = win.reshape(ho * wo, c_slab)
                d = jnp.dot(win, w[p, t * c_slab:(t + 1) * c_slab, :],
                            preferred_element_type=jnp.float32)
                acc = d if acc is None else acc + d
            outs.append(acc)
        res = outs[0] if num_phases == 1 else jnp.concatenate(outs, axis=-1)
        o_ref[...] = res.reshape(1, ho, wo, num_phases * c_out)
        sum_ref[...] = jnp.sum(res, axis=0).reshape(1, 1, -1)
        sq_ref[...] = jnp.sum(res * res, axis=0).reshape(1, 1, -1)

    return kernel


def _bn_relu_stats_kernel(x_ref, s_ref, b_ref, o_ref, sum_ref, sq_ref):
    y = jnp.maximum(x_ref[...] * s_ref[...] + b_ref[...], 0.0)
    o_ref[...] = y
    sum_ref[...] = jnp.sum(y, axis=0).reshape(1, 1, -1)
    sq_ref[...] = jnp.sum(y * y, axis=0).reshape(1, 1, -1)


def _add_stats_kernel(a_ref, b_ref, o_ref, sum_ref, sq_ref):
    y = a_ref[...] + b_ref[...]
    o_ref[...] = y
    sum_ref[...] = jnp.sum(y, axis=0).reshape(1, 1, -1)
    sq_ref[...] = jnp.sum(y * y, axis=0).reshape(1, 1, -1)


def _softmax_head_kernel(x_ref, w_ref, b_ref, o_ref):
    y = jnp.dot(x_ref[...].astype(jnp.bfloat16), w_ref[...],
                preferred_element_type=jnp.float32) + b_ref[...]
    m = jnp.max(y, axis=-1, keepdims=True)
    e = jnp.exp(y - m)
    o_ref[...] = e * pl.reciprocal(jnp.sum(e, axis=-1, keepdims=True),
                                   approx=True)


# --------------------------- kernel wrappers ---------------------------------

def _stats_outspecs(c):
    return (pl.BlockSpec((1, 1, c), lambda i: (i, 0, 0)),
            pl.BlockSpec((1, 1, c), lambda i: (i, 0, 0)))


def matmul_stats(x, w, scale=None, shift=None):
    m, k = x.shape
    n = w.shape[1]
    tm = _row_tile(m)
    g = m // tm
    apply_act = scale is not None
    in_specs = [pl.BlockSpec((tm, k), lambda i: (i, 0))]
    args = [x]
    if apply_act:
        in_specs += [pl.BlockSpec((1, k), lambda i: (0, 0)),
                     pl.BlockSpec((1, k), lambda i: (0, 0))]
        args += [scale.reshape(1, k), shift.reshape(1, k)]
    in_specs.append(pl.BlockSpec((k, n), lambda i: (0, 0)))
    args.append(w.astype(jnp.bfloat16))
    out, s, q = pl.pallas_call(
        _make_matmul_stats_kernel(apply_act),
        out_shape=(jax.ShapeDtypeStruct((m, n), jnp.float32),
                   jax.ShapeDtypeStruct((g, 1, n), jnp.float32),
                   jax.ShapeDtypeStruct((g, 1, n), jnp.float32)),
        grid=(g,),
        in_specs=in_specs,
        out_specs=(pl.BlockSpec((tm, n), lambda i: (i, 0)),) + _stats_outspecs(n),
        compiler_params=_cparams(),
    )(*args)
    return out, s.sum(axis=(0, 1)), q.sum(axis=(0, 1))


def clique_1x1(pieces, gamma, beta, weights):
    n, h, w, _ = pieces[0].val.shape
    rows = n * h * w
    c_out = weights[0].shape[1]
    tm = _row_tile(rows)
    g = rows // tm
    npieces = len(pieces)
    xs, ss, bs, ws = [], [], [], []
    off = 0
    for piece, wmat in zip(pieces, weights):
        cp = piece.val.shape[-1]
        scale, shift = affine_from_stats(piece.csum, piece.csq, rows,
                                         gamma[off:off + cp],
                                         beta[off:off + cp])
        xs.append(piece.val.reshape(rows, cp))
        ss.append(scale.reshape(1, cp))
        bs.append(shift.reshape(1, cp))
        ws.append(wmat.astype(jnp.bfloat16))
        off += cp
    in_specs = ([pl.BlockSpec((tm, a.shape[1]), lambda i: (i, 0)) for a in xs] +
                [pl.BlockSpec((1, a.shape[1]), lambda i: (0, 0)) for a in ss] +
                [pl.BlockSpec((1, a.shape[1]), lambda i: (0, 0)) for a in bs] +
                [pl.BlockSpec(a.shape, lambda i: (0, 0)) for a in ws])
    out, s, q = pl.pallas_call(
        _make_clique1x1_kernel(npieces),
        out_shape=(jax.ShapeDtypeStruct((rows, c_out), jnp.float32),
                   jax.ShapeDtypeStruct((g, 1, c_out), jnp.float32),
                   jax.ShapeDtypeStruct((g, 1, c_out), jnp.float32)),
        grid=(g,),
        in_specs=in_specs,
        out_specs=(pl.BlockSpec((tm, c_out), lambda i: (i, 0)),)
                  + _stats_outspecs(c_out),
        compiler_params=_cparams(),
    )(*(xs + ss + bs + ws))
    return TS(out.reshape(n, h, w, c_out),
              s.sum(axis=(0, 1)), q.sum(axis=(0, 1)))


def conv_call(x_prep, w_pack, phases, ho, wo, c_slab, scale=None, shift=None):
    n, hp, wp, cin = x_prep.shape
    num_phases, _, c_out = w_pack.shape
    out_c = num_phases * c_out
    apply_act = scale is not None
    in_specs = [pl.BlockSpec((1, hp, wp, cin), lambda i: (i, 0, 0, 0))]
    args = [x_prep]
    if apply_act:
        in_specs += [pl.BlockSpec((1, 1, cin), lambda i: (0, 0, 0)),
                     pl.BlockSpec((1, 1, cin), lambda i: (0, 0, 0))]
        args += [scale.reshape(1, 1, cin), shift.reshape(1, 1, cin)]
    in_specs.append(pl.BlockSpec(w_pack.shape, lambda i: (0, 0, 0)))
    args.append(w_pack.astype(jnp.bfloat16))
    out, s, q = pl.pallas_call(
        _make_conv_kernel(phases, ho, wo, c_slab, c_out, apply_act),
        out_shape=(jax.ShapeDtypeStruct((n, ho, wo, out_c), jnp.float32),
                   jax.ShapeDtypeStruct((n, 1, out_c), jnp.float32),
                   jax.ShapeDtypeStruct((n, 1, out_c), jnp.float32)),
        grid=(n,),
        in_specs=in_specs,
        out_specs=(pl.BlockSpec((1, ho, wo, out_c), lambda i: (i, 0, 0, 0)),
                   pl.BlockSpec((1, 1, out_c), lambda i: (i, 0, 0)),
                   pl.BlockSpec((1, 1, out_c), lambda i: (i, 0, 0))),
        compiler_params=_cparams(),
    )(*args)
    return out, s.sum(axis=(0, 1)), q.sum(axis=(0, 1))


def bn_relu_stats(ts, gamma, beta):
    n, h, w, c = ts.val.shape
    rows = n * h * w
    scale, shift = affine_from_stats(ts.csum, ts.csq, rows, gamma, beta)
    tm = _row_tile(rows)
    g = rows // tm
    out, s, q = pl.pallas_call(
        _bn_relu_stats_kernel,
        out_shape=(jax.ShapeDtypeStruct((rows, c), jnp.float32),
                   jax.ShapeDtypeStruct((g, 1, c), jnp.float32),
                   jax.ShapeDtypeStruct((g, 1, c), jnp.float32)),
        grid=(g,),
        in_specs=[pl.BlockSpec((tm, c), lambda i: (i, 0)),
                  pl.BlockSpec((1, c), lambda i: (0, 0)),
                  pl.BlockSpec((1, c), lambda i: (0, 0))],
        out_specs=(pl.BlockSpec((tm, c), lambda i: (i, 0)),) + _stats_outspecs(c),
        compiler_params=_cparams(),
    )(ts.val.reshape(rows, c), scale.reshape(1, c), shift.reshape(1, c))
    return TS(out.reshape(n, h, w, c), s.sum(axis=(0, 1)), q.sum(axis=(0, 1)))


def add_stats(a_ts, b_ts):
    n, h, w, c = a_ts.val.shape
    rows = n * h * w
    tm = _row_tile(rows)
    g = rows // tm
    out, s, q = pl.pallas_call(
        _add_stats_kernel,
        out_shape=(jax.ShapeDtypeStruct((rows, c), jnp.float32),
                   jax.ShapeDtypeStruct((g, 1, c), jnp.float32),
                   jax.ShapeDtypeStruct((g, 1, c), jnp.float32)),
        grid=(g,),
        in_specs=[pl.BlockSpec((tm, c), lambda i: (i, 0)),
                  pl.BlockSpec((tm, c), lambda i: (i, 0))],
        out_specs=(pl.BlockSpec((tm, c), lambda i: (i, 0)),) + _stats_outspecs(c),
        compiler_params=_cparams(),
    )(a_ts.val.reshape(rows, c), b_ts.val.reshape(rows, c))
    return TS(out.reshape(n, h, w, c), s.sum(axis=(0, 1)), q.sum(axis=(0, 1)))


def softmax_head(x_rows, w, bias):
    m, k = x_rows.shape
    n = w.shape[1]
    tm = _row_tile(m)
    return pl.pallas_call(
        _softmax_head_kernel,
        out_shape=jax.ShapeDtypeStruct((m, n), jnp.float32),
        grid=(m // tm,),
        in_specs=[pl.BlockSpec((tm, k), lambda i: (i, 0)),
                  pl.BlockSpec((k, n), lambda i: (0, 0)),
                  pl.BlockSpec((1, n), lambda i: (0, 0))],
        out_specs=pl.BlockSpec((tm, n), lambda i: (i, 0)),
        compiler_params=_cparams(),
    )(x_rows, w.astype(jnp.bfloat16), bias.reshape(1, n))


# --------------------------- glue (JAX) helpers ------------------------------

class TS:
    """NHWC activation plus its per-channel batch sum and sum of squares."""
    __slots__ = ("val", "csum", "csq")

    def __init__(self, val, csum, csq):
        self.val, self.csum, self.csq = val, csum, csq

    @property
    def count(self):
        n, h, w, _ = self.val.shape
        return n * h * w


def concat_ts(ts_list):
    return TS(jnp.concatenate([t.val for t in ts_list], axis=-1),
              jnp.concatenate([t.csum for t in ts_list]),
              jnp.concatenate([t.csq for t in ts_list]))


def affine_from_stats(csum, csq, count, gamma, beta):
    # TODO(synk): E[x^2]-E[x]^2 can lose precision for large channel means; a
    # Welford-style two-pass would be safer (clamped at 0 here, never NaN).
    mean = csum / count
    var = jnp.maximum(csq / count - mean * mean, 0.0)
    scale = gamma * jax.lax.rsqrt(var + EPS)
    shift = beta - mean * scale
    return scale, shift


def affine_from_ts(ts, gamma, beta):
    return affine_from_stats(ts.csum, ts.csq, ts.count, gamma, beta)


def neutral_pad(x, pad, scale, shift):
    """Pad with the per-channel value that the fused BN+ReLU maps to exactly 0,
    so zero-padding of the post-activation folds into the conv kernel."""
    n, h, w, c = x.shape
    neutral = (-shift / scale).reshape(1, 1, 1, c)
    out = jnp.broadcast_to(neutral, (n, h + 2 * pad, w + 2 * pad, c))
    return out.at[:, pad:pad + h, pad:pad + w, :].set(x)


def im2col(x, kh, kw, stride, padding, dilation=1):
    n, h, w, c = x.shape
    xp = jnp.pad(x, ((0, 0), (padding, padding), (padding, padding), (0, 0)))
    ho = (h + 2 * padding - dilation * (kh - 1) - 1) // stride + 1
    wo = (w + 2 * padding - dilation * (kw - 1) - 1) // stride + 1
    cols = []
    for i in range(kh):
        for j in range(kw):
            patch = xp[:,
                       i * dilation:i * dilation + stride * (ho - 1) + 1:stride,
                       j * dilation:j * dilation + stride * (wo - 1) + 1:stride,
                       :]
            cols.append(patch)
    patches = jnp.concatenate(cols, axis=-1)
    return patches.reshape(n * ho * wo, kh * kw * c), (n, ho, wo)


# --------------------------- conv builders -----------------------------------

def bottleneck_conv(mid_ts, gamma, beta, w_oihw, dilation):
    """Fused [BN + ReLU + 3x3 dilated conv] via the direct tap-accumulating
    kernel (no materialized im2col)."""
    scale, shift = affine_from_ts(mid_ts, gamma, beta)
    co, ci, kh, kw = w_oihw.shape
    n, h, w, _ = mid_ts.val.shape
    xpad = neutral_pad(mid_ts.val, dilation, scale, shift)
    taps = tuple((i * dilation, j * dilation, 0)
                 for i in range(kh) for j in range(kw))
    w_pack = jnp.transpose(w_oihw, (2, 3, 1, 0)).reshape(1, kh * kw * ci, co)
    out, s, q = conv_call(xpad, w_pack, (taps,), h, w, ci, scale, shift)
    return TS(out, s, q)


def deconv_subpixel(x_ts, gamma, beta, w_iohw):
    """ConvTranspose2d(k=4, stride=2, pad=1) as 4 stride-1 phase convs on the
    1-padded (neutral-border) pre-activation, BN+ReLU fused in (sub-pixel
    decomposition: ~4x fewer MACs than zero-insertion, no im2col)."""
    scale, shift = affine_from_ts(x_ts, gamma, beta)
    ci, co, kh, kw = w_iohw.shape
    n, h, w, _ = x_ts.val.shape
    xpad = neutral_pad(x_ts.val, 1, scale, shift)

    def phase_taps(a):
        # (window offset into the 1-padded input, transposed-kernel index)
        return ((1, 1), (0, 3)) if a == 0 else ((2, 0), (1, 2))

    phases, w_blocks = [], []
    for a in (0, 1):
        for b in (0, 1):
            taps, wm = [], []
            for dy, ky in phase_taps(a):
                for dx, kx in phase_taps(b):
                    taps.append((dy, dx, 0))
                    wm.append(w_iohw[:, :, ky, kx])          # (Ci, Co)
            phases.append(tuple(taps))
            w_blocks.append(jnp.concatenate(wm, axis=0))     # (4*Ci, Co)
    w_pack = jnp.stack(w_blocks, axis=0)                     # (4, 4*Ci, Co)
    out4, s4, q4 = conv_call(xpad, w_pack, tuple(phases), h, w, ci,
                             scale, shift)
    out = out4.reshape(n, h, w, 2, 2, co).transpose(0, 1, 3, 2, 4, 5)
    out = out.reshape(n, 2 * h, 2 * w, co)
    return TS(out, s4.reshape(4, co).sum(axis=0), q4.reshape(4, co).sum(axis=0))


# --------------------------- parameter init ----------------------------------

class KeyGen:
    def __init__(self, key):
        self.key = key

    def __call__(self):
        self.key, sub = jax.random.split(self.key)
        return sub


def conv_weight(kg, cout, cin, kh, kw):
    std = math.sqrt(2.0 / (kh * kw * cout))
    return std * jax.random.normal(kg(), (cout, cin, kh, kw), jnp.float32)


def init_bn(c):
    return jnp.ones((c,), jnp.float32), jnp.zeros((c,), jnp.float32)


def init_clique_block(kg, ic, c, L):
    p = {"ic": ic, "c": c, "L": L}
    p["W_in"] = {i: jnp.transpose(conv_weight(kg, c, ic, 1, 1)[:, :, 0, 0])
                 for i in range(1, L + 1)}                       # (ic, c)
    p["W_cross"] = {}
    for j in range(1, L + 1):
        for i in range(1, L + 1):
            if i != j:
                p["W_cross"][(j, i)] = jnp.transpose(
                    conv_weight(kg, c, c, 1, 1)[:, :, 0, 0])     # (c, c)
    p["bottle"] = {i: conv_weight(kg, c, c, 3, 3) for i in range(1, L + 1)}
    p["fbn"] = [init_bn(ic + i * c) for i in range(L)]
    p["fbn_b"] = [init_bn(c) for _ in range(L)]
    p["lbn"] = [init_bn(c * (L - 1)) for _ in range(L)]
    p["lbn_b"] = [init_bn(c) for _ in range(L)]
    return p


def init_cliquenet(key, input_channels, list_channels, list_layer_num):
    kg = KeyGen(key)
    P = {}
    P["fir_w"] = conv_weight(kg, input_channels, 1, 7, 7)
    P["fir_bn_g"], P["fir_bn_b"] = init_bn(input_channels)
    bn_num = len(list_channels)
    P["down_block"], P["down_trans"] = [], []
    P["up_block"], P["up_trans"] = [None] * bn_num, [None] * bn_num
    for i in range(bn_num):
        ic = input_channels if i == 0 else list_channels[i - 1] * list_layer_num[i - 1]
        P["down_block"].append(init_clique_block(kg, ic, list_channels[i],
                                                 list_layer_num[i]))
        if i < bn_num - 1:
            dc = list_channels[i] * list_layer_num[i]
            g, b = init_bn(dc)
            P["down_trans"].append({"bn_g": g, "bn_b": b,
                                    "conv_w": conv_weight(kg, dc, dc, 3, 3)})
    for i in range(bn_num):
        uc = list_channels[i] * list_layer_num[i]
        g, b = init_bn(uc)
        dw = math.sqrt(2.0 / (16 * uc)) * jax.random.normal(
            kg(), (uc, uc, 4, 4), jnp.float32)                    # (Cin,Cout,4,4)
        up = {"bn_g": g, "bn_b": b, "deconv_w": dw}
        if i == 0:
            up["conv1_w"] = conv_weight(kg, 2, uc, 1, 1)
            # TODO(synk): torch default conv bias init is uniform; deterministic zeros here
            up["conv1_b"] = jnp.zeros((2,), jnp.float32)
        P["up_trans"][i] = up
        if i > 0:
            P["up_block"][i] = init_clique_block(kg, uc, list_channels[i - 1],
                                                 list_layer_num[i - 1])
    return P


# --------------------------- module forwards ---------------------------------

def clique_block_forward(p, x_ts, dilation=2, loop_num=1):
    L = p["L"]
    blob = {}

    def half_layer(pieces, weights, g, b, gb, bb, bottle_w):
        mid = clique_1x1(pieces, g, b, weights)              # BN+ReLU+1x1 conv
        return bottleneck_conv(mid, gb, bb, bottle_w, dilation)

    # Stage I (feed-forward pass)
    for lid in range(1, L + 1):
        pieces = [x_ts] + [blob[j] for j in range(1, lid)]
        weights = [p["W_in"][lid]] + [p["W_cross"][(j, lid)]
                                      for j in range(1, lid)]
        g, b = p["fbn"][lid - 1]
        gb, bb = p["fbn_b"][lid - 1]
        blob[lid] = half_layer(pieces, weights, g, b, gb, bb, p["bottle"][lid])
    # Stage II (recurrent refinement loops)
    for _ in range(loop_num):
        for lid in range(1, L + 1):
            others = [j for j in range(1, L + 1) if j != lid]
            pieces = [blob[j] for j in others]
            weights = [p["W_cross"][(j, lid)] for j in others]
            g, b = p["lbn"][lid - 1]
            gb, bb = p["lbn_b"][lid - 1]
            blob[lid] = half_layer(pieces, weights, g, b, gb, bb,
                                   p["bottle"][lid])
    # block_feature_II: concat of the (final) blob dict, layers 1..L
    return concat_ts([blob[j] for j in range(1, L + 1)])


def down_transition_forward(p, ts):
    scale, shift = affine_from_ts(ts, p["bn_g"], p["bn_b"])
    co, ci, kh, kw = p["conv_w"].shape
    # TODO(synk): the two stride-2 convs (stem, this one) still use a
    # materialized im2col; a space-to-depth direct-conv path would remove it.
    xpad = neutral_pad(ts.val, 1, scale, shift)
    cols, (n, ho, wo) = im2col(xpad, kh, kw, stride=2, padding=0)
    w_mat = jnp.transpose(p["conv_w"], (2, 3, 1, 0)).reshape(kh * kw * ci, co)
    out, s, q = matmul_stats(cols, w_mat,
                             jnp.tile(scale, kh * kw), jnp.tile(shift, kh * kw))
    return TS(out.reshape(n, ho, wo, co), s, q)


def up_transition_forward(p, ts, last=False):
    out_ts = deconv_subpixel(ts, p["bn_g"], p["bn_b"], p["deconv_w"])
    if last:
        n, h, w, c = out_ts.val.shape
        w1 = jnp.transpose(p["conv1_w"][:, :, 0, 0])          # (C, 2)
        # permute(0,2,3,1).view(-1,2).softmax(dim=1) == NHWC rows softmax
        return softmax_head(out_ts.val.reshape(n * h * w, c), w1, p["conv1_b"])
    return out_ts


def cliquenet_forward(params, x_nchw):
    x = jnp.transpose(x_nchw, (0, 2, 3, 1)).astype(jnp.float32)  # NCHW -> NHWC
    # 7x7 stride-2 stem (1-channel input; im2col here is tiny and runs once)
    co, ci, kh, kw = params["fir_w"].shape
    cols, (n, ho, wo) = im2col(x, kh, kw, stride=2, padding=3)
    w_mat = jnp.transpose(params["fir_w"], (2, 3, 1, 0)).reshape(kh * kw * ci, co)
    stem_out, s, q = matmul_stats(cols, w_mat)
    stem_ts = TS(stem_out.reshape(n, ho, wo, co), s, q)
    out_ts = bn_relu_stats(stem_ts, params["fir_bn_g"], params["fir_bn_b"])

    block_num = len(params["down_block"])
    feats = []
    bf = None
    for i in range(block_num):
        bf = clique_block_forward(params["down_block"][i], out_ts)
        feats.append(bf)
        if i < block_num - 1:
            out_ts = down_transition_forward(params["down_trans"][i], bf)
    out = None
    for i in reversed(range(block_num)):
        if i == block_num - 1:
            out = up_transition_forward(params["up_trans"][i], feats[i],
                                        last=(i == 0))
        else:
            merged = add_stats(bf, feats[i])
            out = up_transition_forward(params["up_trans"][i], merged,
                                        last=(i == 0))
        if i > 0:
            bf = clique_block_forward(params["up_block"][i], out)
    return out


# --------------------------- main --------------------------------------------

if __name__ == "__main__":
    key = jax.random.PRNGKey(0)
    pkey, xkey = jax.random.split(key)

    input_channels = 4
    list_channels = [4, 4]
    list_layer_num = [2, 2]

    params = init_cliquenet(pkey, input_channels, list_channels, list_layer_num)
    x = jax.random.normal(xkey, (2, 1, 16, 16), jnp.float32)  # (N, 1, H, W)

    out = cliquenet_forward(params, x)
    out = jax.block_until_ready(out)
    assert out.shape == (2 * 16 * 16, 2), out.shape
    assert bool(jnp.all(jnp.isfinite(out)))
    print("KERNEL_OK")
</pallas_src>

<mosaic_0001>
module attributes {stable_mosaic.version = 11 : i64} {
  func.func @kernel(%arg0: i32, %arg1: memref<128x49xf32, #tpu.memory_space<vmem>>, %arg2: memref<49x4xbf16, #tpu.memory_space<vmem>>, %arg3: memref<128x4xf32, #tpu.memory_space<vmem>>, %arg4: memref<1x1x4xf32, #tpu.memory_space<vmem>>, %arg5: memref<1x1x4xf32, #tpu.memory_space<vmem>>) attributes {dimension_semantics = [#tpu.dimension_semantics<parallel>], iteration_bounds = array<i64: 1>, scalar_prefetch = 0 : i64, scratch_operands = 0 : i64, tpu.core_type = #tpu.core_type<tc>, window_params = [{transform_indices = @transform_0, window_bounds = array<i64: 128, 49>}, {pipeline_mode = #tpu.pipeline_mode<synchronous>, transform_indices = @transform_1, window_bounds = array<i64: 49, 4>}, {transform_indices = @transform_2, window_bounds = array<i64: 128, 4>}, {transform_indices = @transform_3, window_bounds = array<i64: 1, 1, 4>}, {transform_indices = @transform_4, window_bounds = array<i64: 1, 1, 4>}]} {
    %c0 = arith.constant 0 : index
    %c0_0 = arith.constant 0 : index
    %0 = vector.load %arg1[%c0, %c0_0] : memref<128x49xf32, #tpu.memory_space<vmem>>, vector<128x49xf32>
    %1 = arith.truncf %0 : vector<128x49xf32> to vector<128x49xbf16>
    %c0_1 = arith.constant 0 : index
    %c0_2 = arith.constant 0 : index
    %2 = vector.load %arg2[%c0_1, %c0_2] : memref<49x4xbf16, #tpu.memory_space<vmem>>, vector<49x4xbf16>
    %cst = arith.constant dense<0.000000e+00> : vector<128x4xf32>
    %3 = tpu.matmul %1, %2, %cst {dimension_numbers = #tpu.dot_dimension_numbers<[1], [0], [0], [1], [0, 0, 1, 1], [], []>} : vector<128x49xbf16>, vector<49x4xbf16>, vector<128x4xf32> -> vector<128x4xf32>
    %c0_3 = arith.constant 0 : index
    %c0_4 = arith.constant 0 : index
    %4 = vector.load %arg3[%c0_3, %c0_4] : memref<128x4xf32, #tpu.memory_space<vmem>>, vector<128x4xf32>
    tpu.vector_store %arg3[%c0_3, %c0_4], %3 {strides = array<i32>} : memref<128x4xf32, #tpu.memory_space<vmem>>, vector<128x4xf32>,
    %cst_5 = arith.constant dense<0.000000e+00> : vector<4xf32>
    %5 = vector.multi_reduction <add>, %3, %cst_5 [0] : vector<128x4xf32> to vector<4xf32>
    %6 = vector.shape_cast %5 : vector<4xf32> to vector<1x1x4xf32>
    %c0_6 = arith.constant 0 : index
    %c0_7 = arith.constant 0 : index
    %c0_8 = arith.constant 0 : index
    %7 = vector.load %arg4[%c0_6, %c0_7, %c0_8] : memref<1x1x4xf32, #tpu.memory_space<vmem>>, vector<1x1x4xf32>
    tpu.vector_store %arg4[%c0_6, %c0_7, %c0_8], %6 {strides = array<i32>} : memref<1x1x4xf32, #tpu.memory_space<vmem>>, vector<1x1x4xf32>,
    %8 = arith.mulf %3, %3 : vector<128x4xf32>
    %cst_9 = arith.constant dense<0.000000e+00> : vector<4xf32>
    %9 = vector.multi_reduction <add>, %8, %cst_9 [0] : vector<128x4xf32> to vector<4xf32>
    %10 = vector.shape_cast %9 : vector<4xf32> to vector<1x1x4xf32>
    %c0_10 = arith.constant 0 : index
    %c0_11 = arith.constant 0 : index
    %c0_12 = arith.constant 0 : index
    %11 = vector.load %arg5[%c0_10, %c0_11, %c0_12] : memref<1x1x4xf32, #tpu.memory_space<vmem>>, vector<1x1x4xf32>
    tpu.vector_store %arg5[%c0_10, %c0_11, %c0_12], %10 {strides = array<i32>} : memref<1x1x4xf32, #tpu.memory_space<vmem>>, vector<1x1x4xf32>,
    return
  }
  func.func @transform_0(%arg0: i32) -> (i32, i32) {
    %c0_i32 = arith.constant 0 : i32
    %c0_i32_0 = arith.constant 0 : i32
    return %arg0, %c0_i32 : i32, i32
  }
  func.func @transform_1(%arg0: i32) -> (i32, i32) {
    %c0_i32 = arith.constant 0 : i32
    %c0_i32_0 = arith.constant 0 : i32
    %c0_i32_1 = arith.constant 0 : i32
    return %c0_i32, %c0_i32_0 : i32, i32
  }
  func.func @transform_2(%arg0: i32) -> (i32, i32) {
    %c0_i32 = arith.constant 0 : i32
    %c0_i32_0 = arith.constant 0 : i32
    return %arg0, %c0_i32 : i32, i32
  }
  func.func @transform_3(%arg0: i32) -> (i32, i32, i32) {
    %c0_i32 = arith.constant 0 : i32
    %c0_i32_0 = arith.constant 0 : i32
    %c0_i32_1 = arith.constant 0 : i32
    return %arg0, %c0_i32, %c0_i32_0 : i32, i32, i32
  }
  func.func @transform_4(%arg0: i32) -> (i32, i32, i32) {
    %c0_i32 = arith.constant 0 : i32
    %c0_i32_0 = arith.constant 0 : i32
    %c0_i32_1 = arith.constant 0 : i32
    return %arg0, %c0_i32, %c0_i32_0 : i32, i32, i32
  }
}

</mosaic_0001>

<llo_original>
// kernel: tpu_custom_call.1
$region0: #{tpu_custom_call.1}
  #allocation0 [shape = 'u32[]', space=smem, size = 0x4, offset = 0x4, fixed_abs, tag = 'smem constant byte address 0x4 - core index']
  #allocation1 [shape = 'u32[144,128]{1,0:T(1,128)}', space=vmem, size = 0x12000, scoped, tag = 'internal scratch']
  %s0 = inlined_call_operand.vmem [shape: f32[128,49], index: 0, kind: input, shape index: {}]
  %s1 = inlined_call_operand.vmem [shape: bf16[49,4], index: 1, kind: input, shape index: {}]
  %s2 = inlined_call_operand.vmem [shape: f32[128,4], index: 2, kind: output, shape index: {0}]
  %s3 = inlined_call_operand.hbm [shape: f32[1,1,4], index: 3, kind: output, shape index: {1}]
  %s4 = inlined_call_operand.hbm [shape: f32[1,1,4], index: 4, kind: output, shape index: {2}]
  %5 = xla_tuple %s2, %s3, %s4
  %s6 = sld [smem:[#allocation0]]
  $region34: #{tpu_custom_call.1} parent=0
    _
  %s8 = ssub.s32 1, %s6
  %s9 = scalar_select 0, %s8, %s6
  $region1: #{tpu_custom_call.1} parent=0
    #allocation2 [shape = 'u8[512]{0}', space=vmem, size = 0x400, scoped, tag = 'output window, operand 1, single buffered']
    #allocation3 [shape = 's32[1]{0}', space=sflag, size = 0x4, scoped, tag = 'scoped memory for tpu_custom_call.1']
    #allocation4 [shape = 'u8[512]{0}', space=vmem, size = 0x400, scoped, tag = 'output window, operand 2, single buffered']
    #allocation5 [shape = 's32[1]{0}', space=sflag, size = 0x4, scoped, tag = 'scoped memory for tpu_custom_call.1']
    %10 = vsyncpa [#allocation3], 0
    %11 = vsyncpa [#allocation5], 0
    // Predicated region
    $region2: #{tpu_custom_call.1} parent=1 // pred_check
      _
    $region3: #{tpu_custom_call.1} parent=1 // pred_check_branch
      %13 = sbr.rel (0) target = $region5
    $region4: #{tpu_custom_call.1} parent=1 // pred_region
      _
    $region5: #{tpu_custom_call.1} parent=1 // pred_fallthru
      _
    // Predicated region
    $region6: #{tpu_custom_call.1} parent=1 // pred_check
      _
    $region7: #{tpu_custom_call.1} parent=1 // pred_check_branch
      %15 = sbr.rel (0) target = $region9
    $region8: #{tpu_custom_call.1} parent=1 // pred_region
      _
    $region9: #{tpu_custom_call.1} parent=1 // pred_fallthru
      _
    %v17 = vld [vmem:[%s0] sm:$0xff]
    %v18 = vld [vmem:[%s0 + $0x8] sm:$0xff]
    %v19 = vld [vmem:[%s0 + $0x10] sm:$0xff]
    %v20 = vld [vmem:[%s0 + $0x18] sm:$0xff]
    %v21 = vld [vmem:[%s0 + $0x20] sm:$0xff]
    %v22 = vld [vmem:[%s0 + $0x28] sm:$0xff]
    %v23 = vld [vmem:[%s0 + $0x30] sm:$0xff]
    %v24 = vld [vmem:[%s0 + $0x38] sm:$0xff]
    %v25 = vld [vmem:[%s0 + $0x40] sm:$0xff]
    %v26 = vld [vmem:[%s0 + $0x48] sm:$0xff]
    %v27 = vld [vmem:[%s0 + $0x50] sm:$0xff]
    %v28 = vld [vmem:[%s0 + $0x58] sm:$0xff]
    %v29 = vld [vmem:[%s0 + $0x60] sm:$0xff]
    %v30 = vld [vmem:[%s0 + $0x68] sm:$0xff]
    %v31 = vld [vmem:[%s0 + $0x70] sm:$0xff]
    %v32 = vld [vmem:[%s0 + $0x78] sm:$0xff]
    %v33 = vpack.c.bf16 %v18, %v17
    %v34 = vpack.c.bf16 %v20, %v19
    %v35 = vpack.c.bf16 %v22, %v21
    %v36 = vpack.c.bf16 %v24, %v23
    %v37 = vpack.c.bf16 %v26, %v25
    %v38 = vpack.c.bf16 %v28, %v27
    %v39 = vpack.c.bf16 %v30, %v29
    %v40 = vpack.c.bf16 %v32, %v31
    %v41 = vld [vmem:[%s1] sm:$0xf]
    %v42 = vld [vmem:[%s1 + $0x4] sm:$0xf]
    %v43 = vld [vmem:[%s1 + $0x8] sm:$0xf]
    %v44 = vld [vmem:[%s1 + $0xc] sm:$0xf]
    %v45 = vld [vmem:[%s1 + $0x10] sm:$0xf]
    %v46 = vld [vmem:[%s1 + $0x14] sm:$0xf]
    %v47 = vld [vmem:[%s1 + $0x18] sm:$0x1]
    %v55 = vunpack.c.l.b16 %v41
    %v56 = vunpack.c.l.b16 %v42
    %v57 = vunpack.c.l.b16 %v43
    %v58 = vunpack.c.l.b16 %v44
    %v59 = vunpack.c.l.b16 %v45
    %v60 = vunpack.c.l.b16 %v46
    %v61 = vunpack.c.l.b16 %v47
    %v62 = vpack.c.b16 %v56, %v55
    %v63 = vpack.c.b16 %v58, %v57
    %v64 = vpack.c.b16 %v60, %v59
    %v65 = vpack.c.b16 %v61, %v61
    %vm69 = vcmask 400384
    %v71 = vsel %vm69, %v33, 0
    %v74 = vsel %vm69, %v34, 0
    %v77 = vsel %vm69, %v35, 0
    %v80 = vsel %vm69, %v36, 0
    %v83 = vsel %vm69, %v37, 0
    %v86 = vsel %vm69, %v38, 0
    %v89 = vsel %vm69, %v39, 0
    %v92 = vsel %vm69, %v40, 0
    %vm94 = vcmask 1040384
    %v95 = vsel 0, 4294967295, 65535
    %v96 = vsel %vm94, %v95, 0
    %v98 = vand.u32 %v65, %v96
    %100 = vmatprep.subr.bf16.mxu0 0
    %101 = vmatpush1.bf16.msra.mxu0 %v62
    %102 = vmatprep.subr.bf16.mxu0 0
    %103 = vmatpush1.bf16.msra.mxu0 %v63
    %104 = vmatprep.subr.bf16.mxu0 0
    %105 = vmatpush1.bf16.msra.mxu0 %v64
    %106 = vmatprep.subr.bf16.mxu0 0
    %107 = vmatpush1.bf16.msra.mxu0 %v98
    %108 = vmatprep.subr.bf16.mxu0 0
    %109 = vmatpush1.bf16.msra.mxu0 0
    %110 = vmatprep.subr.bf16.mxu0 0
    %111 = vmatpush1.bf16.msra.mxu0 0
    %112 = vmatprep.subr.bf16.mxu0 0
    %113 = vmatpush1.bf16.msra.mxu0 0
    %114 = vmatprep.subr.bf16.mxu0 0
    %115 = vmatpush1.bf16.msra.mxu0 0
    %116 = vmatprep.subr.bf16.mxu0 0
    %117 = vmatpush1.bf16.msra.mxu0 0
    %118 = vmatprep.subr.bf16.mxu0 0
    %119 = vmatpush1.bf16.msra.mxu0 0
    %120 = vmatprep.subr.bf16.mxu0 0
    %121 = vmatpush1.bf16.msra.mxu0 0
    %122 = vmatprep.subr.bf16.mxu0 0
    %123 = vmatpush1.bf16.msra.mxu0 0
    %124 = vmatprep.subr.bf16.mxu0 0
    %125 = vmatpush1.bf16.msra.mxu0 0
    %126 = vmatprep.subr.bf16.mxu0 0
    %127 = vmatpush1.bf16.msra.mxu0 0
    %128 = vmatprep.subr.bf16.mxu0 0
    %129 = vmatpush1.bf16.msra.mxu0 0
    %130 = vmatprep.subr.bf16.mxu0 0
    %131 = vmatpush1.bf16.msra.mxu0 0
    %132 = vmatprep.mubr.bf16.mxu0 0
    %133 = vmatmul.mubr.bf16.gmra.mrb[0].mxu0 %v71
    %v134 = vpop.f32.mrb[0].mxu0
    %v135 = vadd.f32 0.0, %v134
    %v136 = vpop.f32.mrb[0].mxu0
    %v137 = vpop.f32.mrb[0].mxu0
    %v138 = vadd.f32 0.0, %v137
    %v139 = vpop.f32.mrb[0].mxu0
    %140 = vmatprep.mubr.bf16.mxu0 0
    %141 = vmatmul.mubr.bf16.gmra.mrb[0].mxu0 %v74
    %v142 = vpop.f32.mrb[0].mxu0
    %v143 = vadd.f32 0.0, %v142
    %v144 = vpop.f32.mrb[0].mxu0
    %v145 = vpop.f32.mrb[0].mxu0
    %v146 = vadd.f32 0.0, %v145
    %v147 = vpop.f32.mrb[0].mxu0
    %148 = vmatprep.mubr.bf16.mxu0 0
    %149 = vmatmul.mubr.bf16.gmra.mrb[0].mxu0 %v77
    %v150 = vpop.f32.mrb[0].mxu0
    %v151 = vadd.f32 0.0, %v150
    %v152 = vpop.f32.mrb[0].mxu0
    %v153 = vpop.f32.mrb[0].mxu0
    %v154 = vadd.f32 0.0, %v153
    %v155 = vpop.f32.mrb[0].mxu0
    %156 = vmatprep.mubr.bf16.mxu0 0
    %157 = vmatmul.mubr.bf16.gmra.mrb[0].mxu0 %v80
    %v158 = vpop.f32.mrb[0].mxu0
    %v159 = vadd.f32 0.0, %v158
    %v160 = vpop.f32.mrb[0].mxu0
    %v161 = vpop.f32.mrb[0].mxu0
    %v162 = vadd.f32 0.0, %v161
    %v163 = vpop.f32.mrb[0].mxu0
    %164 = vmatprep.mubr.bf16.mxu0 0
    %165 = vmatmul.mubr.bf16.gmra.mrb[0].mxu0 %v83
    %v166 = vpop.f32.mrb[0].mxu0
    %v167 = vadd.f32 0.0, %v166
    %v168 = vpop.f32.mrb[0].mxu0
    %v169 = vpop.f32.mrb[0].mxu0
    %v170 = vadd.f32 0.0, %v169
    %v171 = vpop.f32.mrb[0].mxu0
    %172 = vmatprep.mubr.bf16.mxu0 0
    %173 = vmatmul.mubr.bf16.gmra.mrb[0].mxu0 %v86
    %v174 = vpop.f32.mrb[0].mxu0
    %v175 = vadd.f32 0.0, %v174
    %v176 = vpop.f32.mrb[0].mxu0
    %v177 = vpop.f32.mrb[0].mxu0
    %v178 = vadd.f32 0.0, %v177
    %v179 = vpop.f32.mrb[0].mxu0
    %180 = vmatprep.mubr.bf16.mxu0 0
    %181 = vmatmul.mubr.bf16.gmra.mrb[0].mxu0 %v89
    %v182 = vpop.f32.mrb[0].mxu0
    %v183 = vadd.f32 0.0, %v182
    %v184 = vpop.f32.mrb[0].mxu0
    %v185 = vpop.f32.mrb[0].mxu0
    %v186 = vadd.f32 0.0, %v185
    %v187 = vpop.f32.mrb[0].mxu0
    %188 = vmatprep.mubr.bf16.mxu0 0
    %189 = vmatmul.mubr.bf16.gmra.mrb[0].mxu0 %v92
    %v190 = vpop.f32.mrb[0].mxu0
    %v191 = vadd.f32 0.0, %v190
    %v192 = vpop.f32.mrb[0].mxu0
    %v193 = vpop.f32.mrb[0].mxu0
    %v194 = vadd.f32 0.0, %v193
    %v195 = vpop.f32.mrb[0].mxu0
    %196 = vdwg.mxu0
    %vm197 = vcmask 31744
    %198 = vst.msk [vmem:[%s2] sm:$0xff] %vm197, %v135
    %199 = vst.msk [vmem:[%s2 + $0x8] sm:$0xff] %vm197, %v138
    %200 = vst.msk [vmem:[%s2 + $0x10] sm:$0xff] %vm197, %v143
    %201 = vst.msk [vmem:[%s2 + $0x18] sm:$0xff] %vm197, %v146
    %202 = vst.msk [vmem:[%s2 + $0x20] sm:$0xff] %vm197, %v151
    %203 = vst.msk [vmem:[%s2 + $0x28] sm:$0xff] %vm197, %v154
    %204 = vst.msk [vmem:[%s2 + $0x30] sm:$0xff] %vm197, %v159
    %205 = vst.msk [vmem:[%s2 + $0x38] sm:$0xff] %vm197, %v162
    %206 = vst.msk [vmem:[%s2 + $0x40] sm:$0xff] %vm197, %v167
    %207 = vst.msk [vmem:[%s2 + $0x48] sm:$0xff] %vm197, %v170
    %208 = vst.msk [vmem:[%s2 + $0x50] sm:$0xff] %vm197, %v175
    %209 = vst.msk [vmem:[%s2 + $0x58] sm:$0xff] %vm197, %v178
    %210 = vst.msk [vmem:[%s2 + $0x60] sm:$0xff] %vm197, %v183
    %211 = vst.msk [vmem:[%s2 + $0x68] sm:$0xff] %vm197, %v186
    %212 = vst.msk [vmem:[%s2 + $0x70] sm:$0xff] %vm197, %v191
    %213 = vst.msk [vmem:[%s2 + $0x78] sm:$0xff] %vm197, %v194
    %v214 = vsel %vm197, %v135, 0.0
    %v215 = vsel %vm197, %v138, 0.0
    %v216 = vadd.f32 %v214, %v215
    %v217 = vsel %vm197, %v143, 0.0
    %v218 = vadd.f32 %v216, %v217
    %v219 = vsel %vm197, %v146, 0.0
    %v220 = vadd.f32 %v218, %v219
    %v221 = vsel %vm197, %v151, 0.0
    %v222 = vadd.f32 %v220, %v221
    %v223 = vsel %vm197, %v154, 0.0
    %v224 = vadd.f32 %v222, %v223
    %v225 = vsel %vm197, %v159, 0.0
    %v226 = vadd.f32 %v224, %v225
    %v227 = vsel %vm197, %v162, 0.0
    %v228 = vadd.f32 %v226, %v227
    %v229 = vsel %vm197, %v167, 0.0
    %v230 = vadd.f32 %v228, %v229
    %v231 = vsel %vm197, %v170, 0.0
    %v232 = vadd.f32 %v230, %v231
    %v233 = vsel %vm197, %v175, 0.0
    %v234 = vadd.f32 %v232, %v233
    %v235 = vsel %vm197, %v178, 0.0
    %v236 = vadd.f32 %v234, %v235
    %v237 = vsel %vm197, %v183, 0.0
    %v238 = vadd.f32 %v236, %v237
    %v239 = vsel %vm197, %v186, 0.0
    %v240 = vadd.f32 %v238, %v239
    %v241 = vsel %vm197, %v191, 0.0
    %v242 = vadd.f32 %v240, %v241
    %v243 = vsel %vm197, %v194, 0.0
    %v244 = vadd.f32 %v242, %v243
    %v245 = vrot.slane %v244, 4
    %v246 = vadd.f32 %v244, %v245
    %v247 = vrot.slane %v246, 2
    %v248 = vadd.f32 %v246, %v247
    %v249 = vrot.slane %v248, 1
    %v250 = vadd.f32 %v248, %v249
    %vm251 = vcmask 24576
    %252 = vst.msk [vmem:[#allocation2] sm:$0x1] %vm251, %v250
    %v253 = vmul.f32 %v135, %v135
    %v254 = vmul.f32 %v138, %v138
    %v255 = vmul.f32 %v143, %v143
    %v256 = vmul.f32 %v146, %v146
    %v257 = vmul.f32 %v151, %v151
    %v258 = vmul.f32 %v154, %v154
    %v259 = vmul.f32 %v159, %v159
    %v260 = vmul.f32 %v162, %v162
    %v261 = vmul.f32 %v167, %v167
    %v262 = vmul.f32 %v170, %v170
    %v263 = vmul.f32 %v175, %v175
    %v264 = vmul.f32 %v178, %v178
    %v265 = vmul.f32 %v183, %v183
    %v266 = vmul.f32 %v186, %v186
    %v267 = vmul.f32 %v191, %v191
    %v268 = vmul.f32 %v194, %v194
    %v269 = vsel %vm197, %v253, 0.0
    %v270 = vsel %vm197, %v254, 0.0
    %v271 = vadd.f32 %v269, %v270
    %v272 = vsel %vm197, %v255, 0.0
    %v273 = vadd.f32 %v271, %v272
    %v274 = vsel %vm197, %v256, 0.0
    %v275 = vadd.f32 %v273, %v274
    %v276 = vsel %vm197, %v257, 0.0
    %v277 = vadd.f32 %v275, %v276
    %v278 = vsel %vm197, %v258, 0.0
    %v279 = vadd.f32 %v277, %v278
    %v280 = vsel %vm197, %v259, 0.0
    %v281 = vadd.f32 %v279, %v280
    %v282 = vsel %vm197, %v260, 0.0
    %v283 = vadd.f32 %v281, %v282
    %v284 = vsel %vm197, %v261, 0.0
    %v285 = vadd.f32 %v283, %v284
    %v286 = vsel %vm197, %v262, 0.0
    %v287 = vadd.f32 %v285, %v286
    %v288 = vsel %vm197, %v263, 0.0
    %v289 = vadd.f32 %v287, %v288
    %v290 = vsel %vm197, %v264, 0.0
    %v291 = vadd.f32 %v289, %v290
    %v292 = vsel %vm197, %v265, 0.0
    %v293 = vadd.f32 %v291, %v292
    %v294 = vsel %vm197, %v266, 0.0
    %v295 = vadd.f32 %v293, %v294
    %v296 = vsel %vm197, %v267, 0.0
    %v297 = vadd.f32 %v295, %v296
    %v298 = vsel %vm197, %v268, 0.0
    %v299 = vadd.f32 %v297, %v298
    %v300 = vrot.slane %v299, 4
    %v301 = vadd.f32 %v299, %v300
    %v302 = vrot.slane %v301, 2
    %v303 = vadd.f32 %v301, %v302
    %v304 = vrot.slane %v303, 1
    %v305 = vadd.f32 %v303, %v304
    %306 = vst.msk [vmem:[#allocation4] sm:$0x1] %vm251, %v305
    // Predicated region
    $region10: #{tpu_custom_call.1} parent=1 // pred_check
      _
    $region11: #{tpu_custom_call.1} parent=1 // pred_check_branch
      %308 = sbr.rel (0) target = $region13
    $region12: #{tpu_custom_call.1} parent=1 // pred_region
      _
    $region13: #{tpu_custom_call.1} parent=1 // pred_fallthru
      _
    // Predicated region
    $region14: #{tpu_custom_call.1} parent=1 // pred_check
      _
    $region15: #{tpu_custom_call.1} parent=1 // pred_check_branch
      %310 = sbr.rel (0) target = $region17
    $region16: #{tpu_custom_call.1} parent=1 // pred_region
      %s312 = ssub.s32 16, 16
      %313 = vsyncadd [#allocation3], %s312
      %s315 = sshll.u32 [#allocation2], 4
      %s316 = int_to_ptr.vmem [resolvable:$true] %s315
      %318 = dma.vmem_to_hbm [thread:$0]  %s316, 16, %s3, [#allocation3]
    $region17: #{tpu_custom_call.1} parent=1 // pred_fallthru
      _
    // Predicated region
    $region18: #{tpu_custom_call.1} parent=1 // pred_check
      _
    $region19: #{tpu_custom_call.1} parent=1 // pred_check_branch
      %320 = sbr.rel (0) target = $region21
    $region20: #{tpu_custom_call.1} parent=1 // pred_region
      %s322 = ssub.s32 16, 16
      %323 = vsyncadd [#allocation5], %s322
      %s325 = sshll.u32 [#allocation4], 4
      %s326 = int_to_ptr.vmem [resolvable:$true] %s325
      %328 = dma.vmem_to_hbm [thread:$0]  %s326, 16, %s4, [#allocation5]
    $region21: #{tpu_custom_call.1} parent=1 // pred_fallthru
      _
    // Predicated region
    $region22: #{tpu_custom_call.1} parent=1 // pred_check
      _
    $region23: #{tpu_custom_call.1} parent=1 // pred_check_branch
      %330 = sbr.rel (0) target = $region25
    $region24: #{tpu_custom_call.1} parent=1 // pred_region
      _
    $region25: #{tpu_custom_call.1} parent=1 // pred_fallthru
      _
    // Predicated region
    $region26: #{tpu_custom_call.1} parent=1 // pred_check
      _
    $region27: #{tpu_custom_call.1} parent=1 // pred_check_branch
      %332 = sbr.rel (0) target = $region29
    $region28: #{tpu_custom_call.1} parent=1 // pred_region
      %333 = dma.done [#allocation3], 16
    $region29: #{tpu_custom_call.1} parent=1 // pred_fallthru
      _
    // Predicated region
    $region30: #{tpu_custom_call.1} parent=1 // pred_check
      _
    $region31: #{tpu_custom_call.1} parent=1 // pred_check_branch
      %335 = sbr.rel (0) target = $region33
    $region32: #{tpu_custom_call.1} parent=1 // pred_region
      %336 = dma.done [#allocation5], 16
    $region33: #{tpu_custom_call.1} parent=1 // pred_fallthru
      _
    %337 = vsyncpa [#allocation3], 1
    %338 = vsyncpa [#allocation5], 1

</llo_original>
